<compile_context>
chip_gen: v6e
topology: v6e:2x2x1
jax: 0.10.0
libtpu: 0.0.40
codegen_flags: <defaults>
</compile_context>

<pallas_src>
import functools

import jax
import jax.numpy as jnp
from jax.experimental import pallas as pl
from jax.experimental.pallas import tpu as pltpu

LANE = 128      # vreg lane width
SUBLANE = 8     # f32 sublane count


def _round_up(n, m):
    return ((n + m - 1) // m) * m


# ----------------------------------------------------------------------------
# Kernel
# ----------------------------------------------------------------------------
def actor_musigma_kernel(x_ref, w1_ref, b1_ref, w2_ref, b2_ref,
                         wh_ref, bh_ref, out_ref, *, action_dim):
    x = x_ref[...]                                                   # [TB, S]

    # fc1 + tanh
    h1 = jnp.dot(x, w1_ref[...], preferred_element_type=jnp.float32)
    h1 = jnp.tanh(h1 + b1_ref[...])                                  # [TB, Wp]

    # fc2 + tanh
    h2 = jnp.dot(h1, w2_ref[...], preferred_element_type=jnp.float32)
    h2 = jnp.tanh(h2 + b2_ref[...])                                  # [TB, Wp]

    # Fused mu|sigma head: one MXU pass over the concatenated weights.
    z = jnp.dot(h2, wh_ref[...], preferred_element_type=jnp.float32)
    z = z + bh_ref[...]                                              # [TB, Hp]

    # Shared transcendental: e = exp(-|z|) feeds both sigmoid and softplus.
    e = jnp.exp(-jnp.abs(z))
    r = pl.reciprocal(1.0 + e, approx=True)                          # EUP vrcp
    sig = jnp.where(z >= 0.0, r, e * r)                              # sigmoid(z)
    sp = jnp.maximum(z, 0.0) + jnp.log(1.0 + e)                      # softplus(z)

    # mu lives in lanes [0, action_dim), sigma in lanes [action_dim, 2*action_dim).
    lane = jax.lax.broadcasted_iota(jnp.int32, z.shape, 1)
    out = jnp.where(lane < action_dim, sig, sp)
    out_ref[...] = out.astype(out_ref.dtype)


# ----------------------------------------------------------------------------
# Wrapper
# ----------------------------------------------------------------------------
def gaussian_actor_musigma_forward(x, padded_params, action_dim, block_b=1024):
    """x: [batch, state_dim] f32.  padded_params: lane-padded weight dict with
    fused heads.  Returns (mu, sigma), each [batch, action_dim]."""
    pp = padded_params
    B, S = x.shape
    Wp = pp["w1"].shape[1]         # padded net_width
    Hp = pp["w_heads"].shape[1]    # padded 2*action_dim (fused head lanes)

    # Batch tile: multiple of 8 sublanes, capped at block_b rows, and sized so
    # that batches bigger than one sublane produce >=2 grid steps (megacore).
    TB = min(block_b, _round_up(max(-(-B // 2), SUBLANE), SUBLANE))
    Bp = _round_up(B, TB)
    if Bp != B:
        x = jnp.pad(x, ((0, Bp - B), (0, 0)))
    grid = (Bp // TB,)

    def resident(shape):
        # Same block index every grid step -> stays in VMEM, no re-DMA.
        return pl.BlockSpec(shape, lambda i: (0, 0))

    cost = pl.CostEstimate(
        flops=2 * Bp * (S * Wp + Wp * Wp + Wp * Hp),
        transcendentals=Bp * (2 * Wp + 3 * Hp),
        bytes_accessed=4 * (Bp * S + Bp * Hp
                            + S * Wp + Wp * Wp + Wp * Hp
                            + 2 * Wp + Hp),
    )

    out = pl.pallas_call(
        functools.partial(actor_musigma_kernel, action_dim=action_dim),
        grid=grid,
        out_shape=jax.ShapeDtypeStruct((Bp, Hp), jnp.float32),
        in_specs=[
            pl.BlockSpec((TB, S), lambda i: (i, 0)),   # x (batch-tiled)
            resident((S, Wp)),  resident((1, Wp)),      # fc1
            resident((Wp, Wp)), resident((1, Wp)),      # fc2
            resident((Wp, Hp)), resident((1, Hp)),      # fused mu|sigma head
        ],
        out_specs=pl.BlockSpec((TB, Hp), lambda i: (i, 0)),
        compiler_params=pltpu.CompilerParams(
            dimension_semantics=("parallel",)),
        cost_estimate=cost,
    )(x, pp["w1"], pp["b1"], pp["w2"], pp["b2"],
      pp["w_heads"], pp["b_heads"])

    mu = out[:B, :action_dim]
    sigma = out[:B, action_dim:2 * action_dim]
    return mu, sigma


# ----------------------------------------------------------------------------
# Parameter init (mimics torch.nn.Linear defaults) + lane padding / head fusion
# ----------------------------------------------------------------------------
def init_params(key, state_dim, net_width, action_dim):
    ks = jax.random.split(key, 8)

    def linear_init(kw, kb, fan_in, fan_out):
        bound = 1.0 / float(fan_in) ** 0.5
        # PyTorch stores W as [out, in]; we store transposed [in, out].
        w = jax.random.uniform(kw, (fan_in, fan_out), jnp.float32, -bound, bound)
        b = jax.random.uniform(kb, (1, fan_out), jnp.float32, -bound, bound)
        return w, b

    w1, b1 = linear_init(ks[0], ks[1], state_dim, net_width)
    w2, b2 = linear_init(ks[2], ks[3], net_width, net_width)
    wmu, bmu = linear_init(ks[4], ks[5], net_width, action_dim)
    wsg, bsg = linear_init(ks[6], ks[7], net_width, action_dim)
    return {"w1": w1, "b1": b1, "w2": w2, "b2": b2,
            "w_mu": wmu, "b_mu": bmu, "w_sigma": wsg, "b_sigma": bsg}


def pad_params(p):
    """Lane-pad to multiples of 128 and fuse the mu/sigma heads (done once)."""
    S = p["w1"].shape[0]
    W = p["w1"].shape[1]
    A = p["w_mu"].shape[1]
    Wp = _round_up(W, LANE)
    Hp = _round_up(2 * A, LANE)

    def pad2(a, rows, cols):
        return jnp.pad(a, ((0, rows - a.shape[0]), (0, cols - a.shape[1])))

    w_heads = jnp.concatenate([p["w_mu"], p["w_sigma"]], axis=1)   # [W, 2A]
    b_heads = jnp.concatenate([p["b_mu"], p["b_sigma"]], axis=1)   # [1, 2A]

    return {
        "w1": pad2(p["w1"], S, Wp),   "b1": pad2(p["b1"], 1, Wp),
        "w2": pad2(p["w2"], Wp, Wp),  "b2": pad2(p["b2"], 1, Wp),
        "w_heads": pad2(w_heads, Wp, Hp),
        "b_heads": pad2(b_heads, 1, Hp),
    }


def reference_forward(x, p):
    h1 = jnp.tanh(x @ p["w1"] + p["b1"])
    h2 = jnp.tanh(h1 @ p["w2"] + p["b2"])
    mu = jax.nn.sigmoid(h2 @ p["w_mu"] + p["b_mu"])
    sigma = jax.nn.softplus(h2 @ p["w_sigma"] + p["b_sigma"])
    return mu, sigma


if __name__ == "__main__":
    batch, state_dim, net_width, action_dim = 4, 16, 32, 8

    key = jax.random.PRNGKey(0)
    kx, kp = jax.random.split(key)
    x = jax.random.normal(kx, (batch, state_dim), jnp.float32)
    params = init_params(kp, state_dim, net_width, action_dim)
    padded = pad_params(params)

    mu, sigma = gaussian_actor_musigma_forward(x, padded, action_dim)
    mu = jax.block_until_ready(mu)
    sigma = jax.block_until_ready(sigma)

    mu_ref, sigma_ref = reference_forward(x, params)
    assert mu.shape == (batch, action_dim)
    assert sigma.shape == (batch, action_dim)
    # Tolerance accounts for the approximate EUP reciprocal in the sigmoid.
    assert jnp.allclose(mu, mu_ref, atol=1e-2, rtol=1e-2)
    assert jnp.allclose(sigma, sigma_ref, atol=1e-3, rtol=1e-3)
    assert bool(jnp.all(sigma > 0.0))

    # TODO(synk): torch.distributions.Normal in get_dist() (sampling/log_prob)
    # is left outside this kernel; only the forward (mu, sigma) is in-kernel.
    print("KERNEL_OK")
</pallas_src>

<mosaic_0001>
module attributes {stable_mosaic.version = 11 : i64} {
  func.func @actor_musigma_kernel(%arg0: i32, %arg1: memref<8x16xf32, #tpu.memory_space<vmem>>, %arg2: memref<16x128xf32, #tpu.memory_space<vmem>>, %arg3: memref<1x128xf32, #tpu.memory_space<vmem>>, %arg4: memref<128x128xf32, #tpu.memory_space<vmem>>, %arg5: memref<1x128xf32, #tpu.memory_space<vmem>>, %arg6: memref<128x128xf32, #tpu.memory_space<vmem>>, %arg7: memref<1x128xf32, #tpu.memory_space<vmem>>, %arg8: memref<8x128xf32, #tpu.memory_space<vmem>>) attributes {dimension_semantics = [#tpu.dimension_semantics<parallel>], iteration_bounds = array<i64: 1>, scalar_prefetch = 0 : i64, scratch_operands = 0 : i64, tpu.core_type = #tpu.core_type<tc>, window_params = [{transform_indices = @transform_0, window_bounds = array<i64: 8, 16>}, {pipeline_mode = #tpu.pipeline_mode<synchronous>, transform_indices = @transform_1, window_bounds = array<i64: 16, 128>}, {pipeline_mode = #tpu.pipeline_mode<synchronous>, transform_indices = @transform_2, window_bounds = array<i64: 1, 128>}, {pipeline_mode = #tpu.pipeline_mode<synchronous>, transform_indices = @transform_3, window_bounds = array<i64: 128, 128>}, {pipeline_mode = #tpu.pipeline_mode<synchronous>, transform_indices = @transform_4, window_bounds = array<i64: 1, 128>}, {pipeline_mode = #tpu.pipeline_mode<synchronous>, transform_indices = @transform_5, window_bounds = array<i64: 128, 128>}, {pipeline_mode = #tpu.pipeline_mode<synchronous>, transform_indices = @transform_6, window_bounds = array<i64: 1, 128>}, {transform_indices = @transform_7, window_bounds = array<i64: 8, 128>}]} {
    %c0 = arith.constant 0 : index
    %c0_0 = arith.constant 0 : index
    %0 = vector.load %arg1[%c0, %c0_0] : memref<8x16xf32, #tpu.memory_space<vmem>>, vector<8x16xf32>
    %c0_1 = arith.constant 0 : index
    %c0_2 = arith.constant 0 : index
    %1 = vector.load %arg2[%c0_1, %c0_2] : memref<16x128xf32, #tpu.memory_space<vmem>>, vector<16x128xf32>
    %cst = arith.constant dense<0.000000e+00> : vector<8x128xf32>
    %2 = tpu.matmul %0, %1, %cst {dimension_numbers = #tpu.dot_dimension_numbers<[1], [0], [0], [1], [0, 0, 1, 1], [], []>} : vector<8x16xf32>, vector<16x128xf32>, vector<8x128xf32> -> vector<8x128xf32>
    %c0_3 = arith.constant 0 : index
    %c0_4 = arith.constant 0 : index
    %3 = vector.load %arg3[%c0_3, %c0_4] : memref<1x128xf32, #tpu.memory_space<vmem>>, vector<1x128xf32>
    %4 = vector.broadcast %3 : vector<1x128xf32> to vector<8x128xf32>
    %5 = arith.addf %2, %4 : vector<8x128xf32>
    %6 = math.tanh %5 : vector<8x128xf32>
    %c0_5 = arith.constant 0 : index
    %c0_6 = arith.constant 0 : index
    %7 = vector.load %arg4[%c0_5, %c0_6] : memref<128x128xf32, #tpu.memory_space<vmem>>, vector<128x128xf32>
    %cst_7 = arith.constant dense<0.000000e+00> : vector<8x128xf32>
    %8 = tpu.matmul %6, %7, %cst_7 {dimension_numbers = #tpu.dot_dimension_numbers<[1], [0], [0], [1], [0, 0, 1, 1], [], []>} : vector<8x128xf32>, vector<128x128xf32>, vector<8x128xf32> -> vector<8x128xf32>
    %c0_8 = arith.constant 0 : index
    %c0_9 = arith.constant 0 : index
    %9 = vector.load %arg5[%c0_8, %c0_9] : memref<1x128xf32, #tpu.memory_space<vmem>>, vector<1x128xf32>
    %10 = vector.broadcast %9 : vector<1x128xf32> to vector<8x128xf32>
    %11 = arith.addf %8, %10 : vector<8x128xf32>
    %12 = math.tanh %11 : vector<8x128xf32>
    %c0_10 = arith.constant 0 : index
    %c0_11 = arith.constant 0 : index
    %13 = vector.load %arg6[%c0_10, %c0_11] : memref<128x128xf32, #tpu.memory_space<vmem>>, vector<128x128xf32>
    %cst_12 = arith.constant dense<0.000000e+00> : vector<8x128xf32>
    %14 = tpu.matmul %12, %13, %cst_12 {dimension_numbers = #tpu.dot_dimension_numbers<[1], [0], [0], [1], [0, 0, 1, 1], [], []>} : vector<8x128xf32>, vector<128x128xf32>, vector<8x128xf32> -> vector<8x128xf32>
    %c0_13 = arith.constant 0 : index
    %c0_14 = arith.constant 0 : index
    %15 = vector.load %arg7[%c0_13, %c0_14] : memref<1x128xf32, #tpu.memory_space<vmem>>, vector<1x128xf32>
    %16 = vector.broadcast %15 : vector<1x128xf32> to vector<8x128xf32>
    %17 = arith.addf %14, %16 : vector<8x128xf32>
    %18 = math.absf %17 : vector<8x128xf32>
    %cst_15 = arith.constant 0.000000e+00 : f32
    %19 = vector.broadcast %cst_15 : f32 to vector<8x128xf32>
    %20 = arith.subf %19, %18 : vector<8x128xf32>
    %21 = math.exp %20 : vector<8x128xf32>
    %cst_16 = arith.constant 1.000000e+00 : f32
    %22 = vector.broadcast %cst_16 : f32 to vector<8x128xf32>
    %23 = arith.addf %22, %21 : vector<8x128xf32>
    %24 = tpu.reciprocal %23 {approx = true} : vector<8x128xf32> -> vector<8x128xf32>
    %cst_17 = arith.constant 0.000000e+00 : f32
    %25 = vector.broadcast %cst_17 : f32 to vector<8x128xf32>
    %26 = arith.cmpf oge, %17, %25 : vector<8x128xf32>
    %27 = arith.mulf %21, %24 : vector<8x128xf32>
    %28 = arith.select %26, %24, %27 : vector<8x128xi1>, vector<8x128xf32>
    %cst_18 = arith.constant 0.000000e+00 : f32
    %29 = vector.broadcast %cst_18 : f32 to vector<8x128xf32>
    %30 = arith.maximumf %17, %29 : vector<8x128xf32>
    %cst_19 = arith.constant 1.000000e+00 : f32
    %31 = vector.broadcast %cst_19 : f32 to vector<8x128xf32>
    %32 = arith.addf %31, %21 : vector<8x128xf32>
    %33 = math.log %32 : vector<8x128xf32>
    %34 = arith.addf %30, %33 : vector<8x128xf32>
    %35 = tpu.iota {dimensions = array<i32: 1>} : vector<8x128xi32>
    %c8_i32 = arith.constant 8 : i32
    %36 = vector.broadcast %c8_i32 : i32 to vector<8x128xi32>
    %37 = arith.cmpi slt, %35, %36 : vector<8x128xi32>
    %38 = arith.select %37, %28, %34 : vector<8x128xi1>, vector<8x128xf32>
    %c0_20 = arith.constant 0 : index
    %c0_21 = arith.constant 0 : index
    %39 = vector.load %arg8[%c0_20, %c0_21] : memref<8x128xf32, #tpu.memory_space<vmem>>, vector<8x128xf32>
    tpu.vector_store %arg8[%c0_20, %c0_21], %38 {strides = array<i32>} : memref<8x128xf32, #tpu.memory_space<vmem>>, vector<8x128xf32>,
    return
  }
  func.func @transform_0(%arg0: i32) -> (i32, i32) {
    %c0_i32 = arith.constant 0 : i32
    %c0_i32_0 = arith.constant 0 : i32
    return %arg0, %c0_i32 : i32, i32
  }
  func.func @transform_1(%arg0: i32) -> (i32, i32) {
    %c0_i32 = arith.constant 0 : i32
    %c0_i32_0 = arith.constant 0 : i32
    %c0_i32_1 = arith.constant 0 : i32
    return %c0_i32, %c0_i32_0 : i32, i32
  }
  func.func @transform_2(%arg0: i32) -> (i32, i32) {
    %c0_i32 = arith.constant 0 : i32
    %c0_i32_0 = arith.constant 0 : i32
    %c0_i32_1 = arith.constant 0 : i32
    return %c0_i32, %c0_i32_0 : i32, i32
  }
  func.func @transform_3(%arg0: i32) -> (i32, i32) {
    %c0_i32 = arith.constant 0 : i32
    %c0_i32_0 = arith.constant 0 : i32
    %c0_i32_1 = arith.constant 0 : i32
    return %c0_i32, %c0_i32_0 : i32, i32
  }
  func.func @transform_4(%arg0: i32) -> (i32, i32) {
    %c0_i32 = arith.constant 0 : i32
    %c0_i32_0 = arith.constant 0 : i32
    %c0_i32_1 = arith.constant 0 : i32
    return %c0_i32, %c0_i32_0 : i32, i32
  }
  func.func @transform_5(%arg0: i32) -> (i32, i32) {
    %c0_i32 = arith.constant 0 : i32
    %c0_i32_0 = arith.constant 0 : i32
    %c0_i32_1 = arith.constant 0 : i32
    return %c0_i32, %c0_i32_0 : i32, i32
  }
  func.func @transform_6(%arg0: i32) -> (i32, i32) {
    %c0_i32 = arith.constant 0 : i32
    %c0_i32_0 = arith.constant 0 : i32
    %c0_i32_1 = arith.constant 0 : i32
    return %c0_i32, %c0_i32_0 : i32, i32
  }
  func.func @transform_7(%arg0: i32) -> (i32, i32) {
    %c0_i32 = arith.constant 0 : i32
    %c0_i32_0 = arith.constant 0 : i32
    return %arg0, %c0_i32 : i32, i32
  }
}

</mosaic_0001>

<llo_original>
// kernel: tpu_custom_call.1
$region0: #{tpu_custom_call.1}
  #allocation0 [shape = 'u32[]', space=smem, size = 0x4, offset = 0x4, fixed_abs, tag = 'smem constant byte address 0x4 - core index']
  #allocation1 [shape = 'u32[144,128]{1,0:T(1,128)}', space=vmem, size = 0x12000, scoped, tag = 'internal scratch']
  %s0 = inlined_call_operand.hbm [shape: f32[8,16], index: 0, kind: input, shape index: {}]
  %s1 = inlined_call_operand.hbm [shape: f32[16,128], index: 1, kind: input, shape index: {}]
  %s2 = inlined_call_operand.vmem [shape: f32[1,128], index: 2, kind: input, shape index: {}]
  %s3 = inlined_call_operand.hbm [shape: f32[128,128], index: 3, kind: input, shape index: {}]
  %s4 = inlined_call_operand.vmem [shape: f32[1,128], index: 4, kind: input, shape index: {}]
  %s5 = inlined_call_operand.hbm [shape: f32[128,128], index: 5, kind: input, shape index: {}]
  %s6 = inlined_call_operand.vmem [shape: f32[1,128], index: 6, kind: input, shape index: {}]
  %s7 = inlined_call_operand.hbm [shape: f32[8,128], index: 7, kind: output, shape index: {}]
  %s8 = sld [smem:[#allocation0]]
  $region54: #{tpu_custom_call.1} parent=0
    _
  %s10 = ssub.s32 1, %s8
  %s11 = scalar_select 0, %s10, %s8
  $region1: #{tpu_custom_call.1} parent=0
    #allocation2 [shape = 'u8[4096]{0}', space=vmem, size = 0x1000, scoped, tag = 'input window, operand 0, single buffered']
    #allocation3 [shape = 's32[1]{0}', space=sflag, size = 0x4, scoped, tag = 'scoped memory for tpu_custom_call.1']
    #allocation4 [shape = 's32[1]{0}', space=sflag, size = 0x4, scoped, tag = 'scoped memory for tpu_custom_call.1']
    #allocation5 [shape = 'u8[8192]{0}', space=vmem, size = 0x2000, scoped, tag = 'input window, operand 1, single buffered']
    #allocation6 [shape = 's32[1]{0}', space=sflag, size = 0x4, scoped, tag = 'scoped memory for tpu_custom_call.1']
    #allocation7 [shape = 'u8[65536]{0}', space=vmem, size = 0x10000, scoped, tag = 'input window, operand 3, single buffered']
    #allocation8 [shape = 'u8[65536]{0}', space=vmem, size = 0x10000, scoped, tag = 'input window, operand 5, single buffered']
    #allocation9 [shape = 's32[1]{0}', space=sflag, size = 0x4, scoped, tag = 'scoped memory for tpu_custom_call.1']
    #allocation10 [shape = 'u8[4096]{0}', space=vmem, size = 0x1000, scoped, tag = 'output window, operand 0, single buffered']
    %12 = vsyncpa [#allocation3], 0
    %13 = vsyncpa [#allocation6], 0
    %14 = vsyncpa [#allocation9], 0
    %15 = vsyncpa [#allocation4], 0
    // Predicated region
    $region2: #{tpu_custom_call.1} parent=1 // pred_check
      _
    $region3: #{tpu_custom_call.1} parent=1 // pred_check_branch
      %17 = sbr.rel (0) target = $region5
    $region4: #{tpu_custom_call.1} parent=1 // pred_region
      %s19 = ssub.s32 128, 128
      %20 = vsyncadd [#allocation3], %s19
      %s22 = sshll.u32 [#allocation2], 4
      %s23 = int_to_ptr.vmem [resolvable:$true] %s22
      %25 = dma.hbm_to_vmem [thread:$0]  %s0, 128, %s23, [#allocation3]
    $region5: #{tpu_custom_call.1} parent=1 // pred_fallthru
      _
    // Predicated region
    $region6: #{tpu_custom_call.1} parent=1 // pred_check
      _
    $region7: #{tpu_custom_call.1} parent=1 // pred_check_branch
      %27 = sbr.rel (0) target = $region9
    $region8: #{tpu_custom_call.1} parent=1 // pred_region
      %s29 = ssub.s32 256, 256
      %30 = vsyncadd [#allocation6], %s29
      %s31 = sshll.u32 [#allocation5], 4
      %s32 = int_to_ptr.vmem [resolvable:$true] %s31
      %37 = dma.hbm_to_vmem [thread:$0]  %s1, 256, %s32, [#allocation6], 128, 128, 8
    $region9: #{tpu_custom_call.1} parent=1 // pred_fallthru
      _
    // Predicated region
    $region10: #{tpu_custom_call.1} parent=1 // pred_check
      _
    $region11: #{tpu_custom_call.1} parent=1 // pred_check_branch
      %39 = sbr.rel (0) target = $region13
    $region12: #{tpu_custom_call.1} parent=1 // pred_region
      _
    $region13: #{tpu_custom_call.1} parent=1 // pred_fallthru
      _
    // Predicated region
    $region14: #{tpu_custom_call.1} parent=1 // pred_check
      _
    $region15: #{tpu_custom_call.1} parent=1 // pred_check_branch
      %41 = sbr.rel (0) target = $region17
    $region16: #{tpu_custom_call.1} parent=1 // pred_region
      %s43 = ssub.s32 2048, 2048
      %44 = vsyncadd [#allocation6], %s43
      %s45 = sshll.u32 [#allocation7], 4
      %s46 = int_to_ptr.vmem [resolvable:$true] %s45
      %51 = dma.hbm_to_vmem [thread:$0]  %s3, 2048, %s46, [#allocation6], 128, 128, 8
    $region17: #{tpu_custom_call.1} parent=1 // pred_fallthru
      _
    // Predicated region
    $region18: #{tpu_custom_call.1} parent=1 // pred_check
      _
    $region19: #{tpu_custom_call.1} parent=1 // pred_check_branch
      %53 = sbr.rel (0) target = $region21
    $region20: #{tpu_custom_call.1} parent=1 // pred_region
      _
    $region21: #{tpu_custom_call.1} parent=1 // pred_fallthru
      _
    // Predicated region
    $region22: #{tpu_custom_call.1} parent=1 // pred_check
      _
    $region23: #{tpu_custom_call.1} parent=1 // pred_check_branch
      %55 = sbr.rel (0) target = $region25
    $region24: #{tpu_custom_call.1} parent=1 // pred_region
      %s57 = ssub.s32 2048, 2048
      %58 = vsyncadd [#allocation9], %s57
      %s59 = sshll.u32 [#allocation8], 4
      %s60 = int_to_ptr.vmem [resolvable:$true] %s59
      %65 = dma.hbm_to_vmem [thread:$0]  %s5, 2048, %s60, [#allocation9], 128, 128, 8
    $region25: #{tpu_custom_call.1} parent=1 // pred_fallthru
      _
    // Predicated region
    $region26: #{tpu_custom_call.1} parent=1 // pred_check
      _
    $region27: #{tpu_custom_call.1} parent=1 // pred_check_branch
      %67 = sbr.rel (0) target = $region29
    $region28: #{tpu_custom_call.1} parent=1 // pred_region
      _
    $region29: #{tpu_custom_call.1} parent=1 // pred_fallthru
      _
    // Predicated region
    $region30: #{tpu_custom_call.1} parent=1 // pred_check
      _
    $region31: #{tpu_custom_call.1} parent=1 // pred_check_branch
      %69 = sbr.rel (0) target = $region33
    $region32: #{tpu_custom_call.1} parent=1 // pred_region
      %70 = dma.done [#allocation3], 128
    $region33: #{tpu_custom_call.1} parent=1 // pred_fallthru
      _
    // Predicated region
    $region34: #{tpu_custom_call.1} parent=1 // pred_check
      _
    $region35: #{tpu_custom_call.1} parent=1 // pred_check_branch
      %72 = sbr.rel (0) target = $region37
    $region36: #{tpu_custom_call.1} parent=1 // pred_region
      %73 = dma.done [#allocation6], 256
    $region37: #{tpu_custom_call.1} parent=1 // pred_fallthru
      _
    // Predicated region
    $region38: #{tpu_custom_call.1} parent=1 // pred_check
      _
    $region39: #{tpu_custom_call.1} parent=1 // pred_check_branch
      %75 = sbr.rel (0) target = $region41
    $region40: #{tpu_custom_call.1} parent=1 // pred_region
      %76 = dma.done [#allocation6], 2048
    $region41: #{tpu_custom_call.1} parent=1 // pred_fallthru
      _
    // Predicated region
    $region42: #{tpu_custom_call.1} parent=1 // pred_check
      _
    $region43: #{tpu_custom_call.1} parent=1 // pred_check_branch
      %78 = sbr.rel (0) target = $region45
    $region44: #{tpu_custom_call.1} parent=1 // pred_region
      %79 = dma.done [#allocation9], 2048
    $region45: #{tpu_custom_call.1} parent=1 // pred_fallthru
      _
    %v80 = vld [vmem:[#allocation2] sm:$0xff]
    %v81 = vld [vmem:[#allocation5] sm:$0xff]
    %v82 = vld [vmem:[#allocation5 + $0x8] sm:$0xff]
    %v83 = vld [vmem:[%s2] sm:$0x1]
    %v85 = vlaneseq
    %v86 = vshrl.u32 %v85, 7
    %v87 = vsub.s32 0, %v86
    %v88 = vrot.slane %v83, %v87
    %vm90 = vcmask 130048
    %v92 = vsel %vm90, %v80, 0
    %94 = vmatprep.subr.mxu0 0.0
    %95 = vmatpush1.msra.mxu0 0.0
    %96 = vmatprep.subr.mxu0 0.0
    %97 = vmatpush1.msra.mxu0 0.0
    %98 = vmatprep.subr.mxu0 0.0
    %99 = vmatpush1.msra.mxu0 0.0
    %100 = vmatprep.subr.mxu0 0.0
    %101 = vmatpush1.msra.mxu0 0.0
    %102 = vmatprep.subr.mxu0 0.0
    %103 = vmatpush1.msra.mxu0 0.0
    %104 = vmatprep.subr.mxu0 0.0
    %105 = vmatpush1.msra.mxu0 0.0
    %106 = vmatprep.subr.mxu0 0.0
    %107 = vmatpush1.msra.mxu0 0.0
    %108 = vmatprep.subr.mxu0 0.0
    %109 = vmatpush1.msra.mxu0 0.0
    %110 = vmatprep.subr.mxu0 0.0
    %111 = vmatpush1.msra.mxu0 0.0
    %112 = vmatprep.subr.mxu0 0.0
    %113 = vmatpush1.msra.mxu0 0.0
    %114 = vmatprep.subr.mxu0 0.0
    %115 = vmatpush1.msra.mxu0 0.0
    %116 = vmatprep.subr.mxu0 0.0
    %117 = vmatpush1.msra.mxu0 0.0
    %118 = vmatprep.subr.mxu0 0.0
    %119 = vmatpush1.msra.mxu0 0.0
    %120 = vmatprep.subr.mxu0 0.0
    %121 = vmatpush1.msra.mxu0 0.0
    %122 = vmatprep.subr.mxu0 0.0
    %123 = vmatpush1.msra.mxu0 %v82
    %124 = vmatprep.subr.mxu0 0.0
    %125 = vmatpush1.msra.mxu0 %v81
    %126 = vmatprep.subr.mxu0 0.0
    %127 = vmatpush2.msra.mxu0 0.0
    %128 = vmatprep.subr.mxu0 0.0
    %129 = vmatpush2.msra.mxu0 0.0
    %130 = vmatprep.subr.mxu0 0.0
    %131 = vmatpush2.msra.mxu0 0.0
    %132 = vmatprep.subr.mxu0 0.0
    %133 = vmatpush2.msra.mxu0 0.0
    %134 = vmatprep.subr.mxu0 0.0
    %135 = vmatpush2.msra.mxu0 0.0
    %136 = vmatprep.subr.mxu0 0.0
    %137 = vmatpush2.msra.mxu0 0.0
    %138 = vmatprep.subr.mxu0 0.0
    %139 = vmatpush2.msra.mxu0 0.0
    %140 = vmatprep.subr.mxu0 0.0
    %141 = vmatpush2.msra.mxu0 0.0
    %142 = vmatprep.subr.mxu0 0.0
    %143 = vmatpush2.msra.mxu0 0.0
    %144 = vmatprep.subr.mxu0 0.0
    %145 = vmatpush2.msra.mxu0 0.0
    %146 = vmatprep.subr.mxu0 0.0
    %147 = vmatpush2.msra.mxu0 0.0
    %148 = vmatprep.subr.mxu0 0.0
    %149 = vmatpush2.msra.mxu0 0.0
    %150 = vmatprep.subr.mxu0 0.0
    %151 = vmatpush2.msra.mxu0 0.0
    %152 = vmatprep.subr.mxu0 0.0
    %153 = vmatpush2.msra.mxu0 0.0
    %154 = vmatprep.subr.mxu0 0.0
    %155 = vmatpush2.msra.mxu0 0.0
    %156 = vmatprep.subr.mxu0 0.0
    %157 = vmatpush2.msra.mxu0 0.0
    %158 = vmatprep.mubr.f32.mxu0 0.0
    %159 = vmatmul.mubr.f32.gmra.mxu0 %v92
    %v160 = vpop.f32.mrf.mxu0
    %v161 = vadd.f32 %v88, %v160
    %v162 = vpop.f32.mrf.mxu0
    %163 = vdwg.mxu0
    %v164 = vtanh.pop %v161
    %v165 = vld [vmem:[#allocation7] sm:$0xff]
    %v166 = vld [vmem:[#allocation7 + $0x8] sm:$0xff]
    %v167 = vld [vmem:[#allocation7 + $0x10] sm:$0xff]
    %v168 = vld [vmem:[#allocation7 + $0x18] sm:$0xff]
    %v169 = vld [vmem:[#allocation7 + $0x20] sm:$0xff]
    %v170 = vld [vmem:[#allocation7 + $0x28] sm:$0xff]
    %v171 = vld [vmem:[#allocation7 + $0x30] sm:$0xff]
    %v172 = vld [vmem:[#allocation7 + $0x38] sm:$0xff]
    %v173 = vld [vmem:[#allocation7 + $0x40] sm:$0xff]
    %v174 = vld [vmem:[#allocation7 + $0x48] sm:$0xff]
    %v175 = vld [vmem:[#allocation7 + $0x50] sm:$0xff]
    %v176 = vld [vmem:[#allocation7 + $0x58] sm:$0xff]
    %v177 = vld [vmem:[#allocation7 + $0x60] sm:$0xff]
    %v178 = vld [vmem:[#allocation7 + $0x68] sm:$0xff]
    %v179 = vld [vmem:[#allocation7 + $0x70] sm:$0xff]
    %v180 = vld [vmem:[#allocation7 + $0x78] sm:$0xff]
    %v181 = vld [vmem:[%s4] sm:$0x1]
    %v183 = vlaneseq
    %v184 = vshrl.u32 %v183, 7
    %v185 = vsub.s32 0, %v184
    %v186 = vrot.slane %v181, %v185
    %188 = vmatprep.subr.mxu0 0.0
    %189 = vmatpush1.msra.mxu0 %v180
    %190 = vmatprep.subr.mxu0 0.0
    %191 = vmatpush1.msra.mxu0 %v179
    %192 = vmatprep.subr.mxu0 0.0
    %193 = vmatpush1.msra.mxu0 %v178
    %194 = vmatprep.subr.mxu0 0.0
    %195 = vmatpush1.msra.mxu0 %v177
    %196 = vmatprep.subr.mxu0 0.0
    %197 = vmatpush1.msra.mxu0 %v176
    %198 = vmatprep.subr.mxu0 0.0
    %199 = vmatpush1.msra.mxu0 %v175
    %200 = vmatprep.subr.mxu0 0.0
    %201 = vmatpush1.msra.mxu0 %v174
    %202 = vmatprep.subr.mxu0 0.0
    %203 = vmatpush1.msra.mxu0 %v173
    %204 = vmatprep.subr.mxu0 0.0
    %205 = vmatpush1.msra.mxu0 %v172
    %206 = vmatprep.subr.mxu0 0.0
    %207 = vmatpush1.msra.mxu0 %v171
    %208 = vmatprep.subr.mxu0 0.0
    %209 = vmatpush1.msra.mxu0 %v170
    %210 = vmatprep.subr.mxu0 0.0
    %211 = vmatpush1.msra.mxu0 %v169
    %212 = vmatprep.subr.mxu0 0.0
    %213 = vmatpush1.msra.mxu0 %v168
    %214 = vmatprep.subr.mxu0 0.0
    %215 = vmatpush1.msra.mxu0 %v167
    %216 = vmatprep.subr.mxu0 0.0
    %217 = vmatpush1.msra.mxu0 %v166
    %218 = vmatprep.subr.mxu0 0.0
    %219 = vmatpush1.msra.mxu0 %v165
    %220 = vmatprep.subr.mxu0 0.0
    %221 = vmatpush2.msra.mxu0 0.0
    %222 = vmatprep.subr.mxu0 0.0
    %223 = vmatpush2.msra.mxu0 0.0
    %224 = vmatprep.subr.mxu0 0.0
    %225 = vmatpush2.msra.mxu0 0.0
    %226 = vmatprep.subr.mxu0 0.0
    %227 = vmatpush2.msra.mxu0 0.0
    %228 = vmatprep.subr.mxu0 0.0
    %229 = vmatpush2.msra.mxu0 0.0
    %230 = vmatprep.subr.mxu0 0.0
    %231 = vmatpush2.msra.mxu0 0.0
    %232 = vmatprep.subr.mxu0 0.0
    %233 = vmatpush2.msra.mxu0 0.0
    %234 = vmatprep.subr.mxu0 0.0
    %235 = vmatpush2.msra.mxu0 0.0
    %236 = vmatprep.subr.mxu0 0.0
    %237 = vmatpush2.msra.mxu0 0.0
    %238 = vmatprep.subr.mxu0 0.0
    %239 = vmatpush2.msra.mxu0 0.0
    %240 = vmatprep.subr.mxu0 0.0
    %241 = vmatpush2.msra.mxu0 0.0
    %242 = vmatprep.subr.mxu0 0.0
    %243 = vmatpush2.msra.mxu0 0.0
    %244 = vmatprep.subr.mxu0 0.0
    %245 = vmatpush2.msra.mxu0 0.0
    %246 = vmatprep.subr.mxu0 0.0
    %247 = vmatpush2.msra.mxu0 0.0
    %248 = vmatprep.subr.mxu0 0.0
    %249 = vmatpush2.msra.mxu0 0.0
    %250 = vmatprep.subr.mxu0 0.0
    %251 = vmatpush2.msra.mxu0 0.0
    %252 = vmatprep.mubr.f32.mxu0 0.0
    %253 = vmatmul.mubr.f32.gmra.mxu0 %v164
    %v254 = vpop.f32.mrf.mxu0
    %v255 = vadd.f32 %v186, %v254
    %v256 = vpop.f32.mrf.mxu0
    %257 = vdwg.mxu0
    %v258 = vtanh.pop %v255
    %v259 = vld [vmem:[#allocation8] sm:$0xff]
    %v260 = vld [vmem:[#allocation8 + $0x8] sm:$0xff]
    %v261 = vld [vmem:[#allocation8 + $0x10] sm:$0xff]
    %v262 = vld [vmem:[#allocation8 + $0x18] sm:$0xff]
    %v263 = vld [vmem:[#allocation8 + $0x20] sm:$0xff]
    %v264 = vld [vmem:[#allocation8 + $0x28] sm:$0xff]
    %v265 = vld [vmem:[#allocation8 + $0x30] sm:$0xff]
    %v266 = vld [vmem:[#allocation8 + $0x38] sm:$0xff]
    %v267 = vld [vmem:[#allocation8 + $0x40] sm:$0xff]
    %v268 = vld [vmem:[#allocation8 + $0x48] sm:$0xff]
    %v269 = vld [vmem:[#allocation8 + $0x50] sm:$0xff]
    %v270 = vld [vmem:[#allocation8 + $0x58] sm:$0xff]
    %v271 = vld [vmem:[#allocation8 + $0x60] sm:$0xff]
    %v272 = vld [vmem:[#allocation8 + $0x68] sm:$0xff]
    %v273 = vld [vmem:[#allocation8 + $0x70] sm:$0xff]
    %v274 = vld [vmem:[#allocation8 + $0x78] sm:$0xff]
    %v275 = vld [vmem:[%s6] sm:$0x1]
    %v277 = vlaneseq
    %v278 = vshrl.u32 %v277, 7
    %v279 = vsub.s32 0, %v278
    %v280 = vrot.slane %v275, %v279
    %282 = vmatprep.subr.mxu0 0.0
    %283 = vmatpush1.msra.mxu0 %v274
    %284 = vmatprep.subr.mxu0 0.0
    %285 = vmatpush1.msra.mxu0 %v273
    %286 = vmatprep.subr.mxu0 0.0
    %287 = vmatpush1.msra.mxu0 %v272
    %288 = vmatprep.subr.mxu0 0.0
    %289 = vmatpush1.msra.mxu0 %v271
    %290 = vmatprep.subr.mxu0 0.0
    %291 = vmatpush1.msra.mxu0 %v270
    %292 = vmatprep.subr.mxu0 0.0
    %293 = vmatpush1.msra.mxu0 %v269
    %294 = vmatprep.subr.mxu0 0.0
    %295 = vmatpush1.msra.mxu0 %v268
    %296 = vmatprep.subr.mxu0 0.0
    %297 = vmatpush1.msra.mxu0 %v267
    %298 = vmatprep.subr.mxu0 0.0
    %299 = vmatpush1.msra.mxu0 %v266
    %300 = vmatprep.subr.mxu0 0.0
    %301 = vmatpush1.msra.mxu0 %v265
    %302 = vmatprep.subr.mxu0 0.0
    %303 = vmatpush1.msra.mxu0 %v264
    %304 = vmatprep.subr.mxu0 0.0
    %305 = vmatpush1.msra.mxu0 %v263
    %306 = vmatprep.subr.mxu0 0.0
    %307 = vmatpush1.msra.mxu0 %v262
    %308 = vmatprep.subr.mxu0 0.0
    %309 = vmatpush1.msra.mxu0 %v261
    %310 = vmatprep.subr.mxu0 0.0
    %311 = vmatpush1.msra.mxu0 %v260
    %312 = vmatprep.subr.mxu0 0.0
    %313 = vmatpush1.msra.mxu0 %v259
    %314 = vmatprep.subr.mxu0 0.0
    %315 = vmatpush2.msra.mxu0 0.0
    %316 = vmatprep.subr.mxu0 0.0
    %317 = vmatpush2.msra.mxu0 0.0
    %318 = vmatprep.subr.mxu0 0.0
    %319 = vmatpush2.msra.mxu0 0.0
    %320 = vmatprep.subr.mxu0 0.0
    %321 = vmatpush2.msra.mxu0 0.0
    %322 = vmatprep.subr.mxu0 0.0
    %323 = vmatpush2.msra.mxu0 0.0
    %324 = vmatprep.subr.mxu0 0.0
    %325 = vmatpush2.msra.mxu0 0.0
    %326 = vmatprep.subr.mxu0 0.0
    %327 = vmatpush2.msra.mxu0 0.0
    %328 = vmatprep.subr.mxu0 0.0
    %329 = vmatpush2.msra.mxu0 0.0
    %330 = vmatprep.subr.mxu0 0.0
    %331 = vmatpush2.msra.mxu0 0.0
    %332 = vmatprep.subr.mxu0 0.0
    %333 = vmatpush2.msra.mxu0 0.0
    %334 = vmatprep.subr.mxu0 0.0
    %335 = vmatpush2.msra.mxu0 0.0
    %336 = vmatprep.subr.mxu0 0.0
    %337 = vmatpush2.msra.mxu0 0.0
    %338 = vmatprep.subr.mxu0 0.0
    %339 = vmatpush2.msra.mxu0 0.0
    %340 = vmatprep.subr.mxu0 0.0
    %341 = vmatpush2.msra.mxu0 0.0
    %342 = vmatprep.subr.mxu0 0.0
    %343 = vmatpush2.msra.mxu0 0.0
    %344 = vmatprep.subr.mxu0 0.0
    %345 = vmatpush2.msra.mxu0 0.0
    %346 = vmatprep.mubr.f32.mxu0 0.0
    %347 = vmatmul.mubr.f32.gmra.mxu0 %v258
    %v348 = vpop.f32.mrf.mxu0
    %v349 = vadd.f32 %v280, %v348
    %v350 = vpop.f32.mrf.mxu0
    %351 = vdwg.mxu0
    %v352 = vand.u32 2147483647, %v349
    %v353 = vsub.f32 0.0, %v352
    %v354 = vmul.f32 %v353, 1.442695
    %v355 = vpow.pop %v354
    %v356 = vadd.f32 %v355, 1.0
    %v357 = vrcp.pop %v356
    %vm358 = vcmp.ge.f32.partialorder %v349, 0.0
    %v359 = vmul.f32 %v355, %v357
    %v360 = vsel %vm358, %v357, %v359
    %v361 = vmax.f32 %v349, 0.0
    %v362 = vlog2.pop %v356
    %v363 = vmul.f32 %v362, 0.6931472
    %v364 = vadd.f32 %v361, %v363
    %v365 = vlaneseq
    %v366 = vand.u32 %v365, 127
    %vm367 = vcmp.lt.s32.totalorder %v366, 8
    %v368 = vsel %vm367, %v360, %v364
    %369 = vst [vmem:[#allocation10] sm:$0xff] %v368
    // Predicated region
    $region46: #{tpu_custom_call.1} parent=1 // pred_check
      _
    $region47: #{tpu_custom_call.1} parent=1 // pred_check_branch
      %371 = sbr.rel (0) target = $region49
    $region48: #{tpu_custom_call.1} parent=1 // pred_region
      %s373 = ssub.s32 128, 128
      %374 = vsyncadd [#allocation4], %s373
      %s376 = sshll.u32 [#allocation10], 4
      %s377 = int_to_ptr.vmem [resolvable:$true] %s376
      %379 = dma.vmem_to_hbm [thread:$0]  %s377, 128, %s7, [#allocation4]
    $region49: #{tpu_custom_call.1} parent=1 // pred_fallthru
      _
    // Predicated region
    $region50: #{tpu_custom_call.1} parent=1 // pred_check
      _
    $region51: #{tpu_custom_call.1} parent=1 // pred_check_branch
      %381 = sbr.rel (0) target = $region53
    $region52: #{tpu_custom_call.1} parent=1 // pred_region
      %382 = dma.done [#allocation4], 128
    $region53: #{tpu_custom_call.1} parent=1 // pred_fallthru
      _
    %383 = vsyncpa [#allocation3], 1
    %384 = vsyncpa [#allocation6], 1
    %385 = vsyncpa [#allocation9], 1
    %386 = vsyncpa [#allocation4], 1

</llo_original>
